<compile_context>
chip_gen: v7x
topology: tpu7x:2x2x1
jax: 0.10.0
libtpu: 0.0.40
codegen_flags: <defaults>
</compile_context>

<pallas_src>
import functools

import jax
import jax.numpy as jnp
from jax.experimental import pallas as pl
from jax.experimental.pallas import tpu as pltpu


def _round_up(a, b):
    return (a + b - 1) // b * b


def _cdiv(a, b):
    return (a + b - 1) // b


def cats_kernel(x_ref, w1_ref, b1_ref, w2_ref, b2_ref, w3_ref, b3_ref, o_ref,
                *, tile_n, emb, hidden_chunks, compute_dtype):
    """One row-tile of the CATS forward pass.

    x_ref : (T, 3*emb) compute_dtype  [:, :emb]=Xq, [:, emb:2emb]=Xp1, [:, 2emb:]=Xp2
    w1_ref: (emb, 5*emb) compute_dtype    b1_ref: (1, 5*emb) f32
    w2_ref: (5*emb, emb) compute_dtype    b2_ref: (1, emb)   f32
    w3_ref: (5, emb) f32  (row k = LL3 weight for the k-th concat block)
    b3_ref: (1,) f32 in SMEM
    o_ref : (1, 1, T) f32  (lane-dense scores)
    """
    t = tile_n
    x = x_ref[...]                                       # (T, 3E)
    xq = x[:, 0 * emb:1 * emb]
    xp1 = x[:, 1 * emb:2 * emb]
    xp2 = x[:, 2 * emb:3 * emb]
    # One fused LL1/LL2 pass over [Xq; Xp1; Xp2] (row-stacked, shared weights).
    xs = jnp.concatenate([xq, xp1, xp2], axis=0)          # (3T, E)

    # LL1 -> relu -> LL2, chunked over the 5*emb hidden dimension.  Exact
    # (relu is elementwise); bounds the peak (3T, chunk) f32 intermediate.
    z = None
    for c0, csz in hidden_chunks:                         # static python loop
        h = jnp.dot(xs, w1_ref[:, c0:c0 + csz],
                    preferred_element_type=jnp.float32)
        h = jnp.maximum(h + b1_ref[:, c0:c0 + csz], 0.0)
        part = jnp.dot(h.astype(compute_dtype), w2_ref[c0:c0 + csz, :],
                       preferred_element_type=jnp.float32)
        z = part if z is None else z + part
    z = jnp.maximum(z + b2_ref[...], 0.0)                 # (3T, E) f32

    zq = z[0 * t:1 * t, :]
    zp1 = z[1 * t:2 * t, :]
    zp2 = z[2 * t:3 * t, :]
    zd = jnp.abs(zp1 - zp2)
    zdqp1 = jnp.abs(zp1 - zq)
    zdqp2 = jnp.abs(zp2 - zq)

    # LL3 on cat([zp1, zp2, zd, zdqp1, zdqp2], dim=1): VPU mul-adds + one lane
    # reduction (free slots next to the MXU) instead of five width-1 MXU dots.
    w3 = w3_ref[...]
    s = (zp1 * w3[0:1, :] + zp2 * w3[1:2, :] + zd * w3[2:3, :]
         + zdqp1 * w3[3:4, :] + zdqp2 * w3[4:5, :])
    score = jnp.sum(s, axis=-1) + b3_ref[0]               # (T,)
    o_ref[...] = jnp.maximum(score, 0.0).reshape(1, 1, t)  # lane-dense store


def _vmem_estimate(tile_n, emb, hidden_chunk, c_itemsize, x_buffers):
    """Rough per-kernel VMEM footprint in bytes (single-buffered weights)."""
    weights = 10 * emb * emb * c_itemsize + (11 * emb) * 4 + 4096
    x_stream = x_buffers * tile_n * 3 * emb * c_itemsize   # pipelined x tiles
    xs_val = 3 * tile_n * emb * c_itemsize                  # stacked [Xq;Xp1;Xp2]
    h = 3 * tile_n * hidden_chunk * (4 + c_itemsize)        # f32 h + cast copy
    z = 3 * tile_n * emb * 4
    work = 6 * tile_n * emb * 4                              # diffs / s working set
    out = 2 * tile_n * 4
    return weights + x_stream + xs_val + h + z + work + out


def cats_forward(x, params, *, compute_dtype=jnp.float32, tile_n_max=1024,
                 hidden_chunk_max=2048, vmem_budget_bytes=36 * 1024 * 1024):
    """x: (N, 3*emb) -> (N,) float32 pairwise CATS scores."""
    w1, b1, w2, b2, w3, b3 = params
    n, three_emb = x.shape
    emb = three_emb // 3
    assert 3 * emb == three_emb
    hidden = 5 * emb
    c_itemsize = jnp.dtype(compute_dtype).itemsize

    # Hidden-dim chunking plan (128-multiple chunks, possibly a short tail).
    hidden_chunk = min(hidden, _round_up(max(128, hidden_chunk_max), 128))
    chunks, c0 = [], 0
    while c0 < hidden:
        csz = min(hidden_chunk, hidden - c0)
        chunks.append((c0, csz))
        c0 += csz
    chunks = tuple(chunks)

    # Deeper x pipelining for tiny emb where per-tile compute < DMA latency.
    x_buffers = 3 if emb < 128 else 2

    # Row tile: largest multiple of 16 that fits the VMEM budget, capped so the
    # grid has >=2 steps (two v7x TensorCores) and never exceeds the data.
    tile_n = max(16, _round_up(min(tile_n_max, _round_up(max(n, 1), 16)), 16))
    if n > 16:
        tile_n = min(tile_n, _round_up(_cdiv(n, 2), 16))
    while tile_n > 16 and _vmem_estimate(
            tile_n, emb, hidden_chunk, c_itemsize, x_buffers) > vmem_budget_bytes:
        tile_n -= 16

    n_pad = _round_up(n, tile_n)
    num_tiles = n_pad // tile_n

    # Operands (x kept in its natural (N, 3*emb) HBM layout; padded tail rows
    # are zeros and are sliced off after the kernel).
    xc = x.astype(compute_dtype)
    if n_pad != n:
        xc = jnp.pad(xc, ((0, n_pad - n), (0, 0)))
    w1c = w1.astype(compute_dtype)
    w2c = w2.astype(compute_dtype)
    b1r = b1.reshape(1, hidden).astype(jnp.float32)
    b2r = b2.reshape(1, emb).astype(jnp.float32)
    w3r = w3.reshape(5, emb).astype(jnp.float32)   # row k = w3[k*emb:(k+1)*emb, 0]
    b3r = b3.reshape(1).astype(jnp.float32)
    operands = (xc, w1c, b1r, w2c, b2r, w3r, b3r)

    flops = 2 * 3 * n * (emb * hidden + hidden * emb) + 12 * n * emb
    bytes_accessed = (n * 3 * emb * c_itemsize + 10 * emb * emb * c_itemsize
                      + (11 * emb + 1) * 4 + n * 4)
    cost = pl.CostEstimate(flops=int(flops), transcendentals=0,
                           bytes_accessed=int(bytes_accessed))

    est = _vmem_estimate(tile_n, emb, hidden_chunk, c_itemsize, x_buffers)
    vmem_limit = int(min(max(est * 3 // 2, 24 * 1024 * 1024), 60 * 1024 * 1024))

    kernel = functools.partial(cats_kernel, tile_n=tile_n, emb=emb,
                               hidden_chunks=chunks, compute_dtype=compute_dtype)
    out_shape = jax.ShapeDtypeStruct((num_tiles, 1, tile_n), jnp.float32)
    out_spec = pl.BlockSpec((1, 1, tile_n), lambda i: (i, 0, 0))
    cparams = pltpu.CompilerParams(dimension_semantics=("parallel",),
                                   vmem_limit_bytes=vmem_limit)

    def make_call(use_buffer_hints):
        def resident(shape):
            if use_buffer_hints:
                return pl.BlockSpec(shape, lambda i: (0, 0),
                                    pipeline_mode=pl.Buffered(1))
            return pl.BlockSpec(shape, lambda i: (0, 0))

        if use_buffer_hints and x_buffers != 2:
            x_spec = pl.BlockSpec((tile_n, 3 * emb), lambda i: (i, 0),
                                  pipeline_mode=pl.Buffered(x_buffers))
        else:
            x_spec = pl.BlockSpec((tile_n, 3 * emb), lambda i: (i, 0))

        in_specs = [
            x_spec,                                   # streamed x row-tile
            resident((emb, hidden)),                  # W1 (resident, 1 buffer)
            resident((1, hidden)),                    # b1
            resident((hidden, emb)),                  # W2
            resident((1, emb)),                       # b2
            resident((5, emb)),                       # W3 (reshaped)
            pl.BlockSpec(memory_space=pltpu.MemorySpace.SMEM),   # b3 scalar
        ]
        return pl.pallas_call(kernel, out_shape=out_shape, grid=(num_tiles,),
                              in_specs=in_specs, out_specs=out_spec,
                              compiler_params=cparams, cost_estimate=cost)

    try:
        out3 = jax.block_until_ready(make_call(True)(*operands))
    except Exception:
        # Fallback without pipeline_mode buffering hints (same kernel body).
        out3 = jax.block_until_ready(make_call(False)(*operands))

    return out3.reshape(-1)[:n]


def init_params(key, emb):
    """Deterministic init mirroring nn.Linear's U(-1/sqrt(fan_in), 1/sqrt(fan_in)).

    Weights are stored transposed, i.e. (in_features, out_features).
    """
    k1, k2, k3, k4, k5, k6 = jax.random.split(key, 6)

    def u(k, shape, fan_in):
        bound = 1.0 / jnp.sqrt(jnp.float32(fan_in))
        return jax.random.uniform(k, shape, jnp.float32, -bound, bound)

    w1 = u(k1, (emb, 5 * emb), emb)        # LL1: emb -> 5*emb
    b1 = u(k2, (5 * emb,), emb)
    w2 = u(k3, (5 * emb, emb), 5 * emb)    # LL2: 5*emb -> emb
    b2 = u(k4, (emb,), 5 * emb)
    w3 = u(k5, (5 * emb, 1), 5 * emb)      # LL3: 5*emb -> 1
    b3 = u(k6, (1,), 5 * emb)
    return (w1, b1, w2, b2, w3, b3)


def cats_reference(x, params, compute_dtype=jnp.float32):
    """Pure-JAX mirror of the PyTorch forward (LL1/LL2 operands in
    compute_dtype with f32 accumulation; LL3 in f32 — same as the kernel)."""
    w1, b1, w2, b2, w3, b3 = params
    emb = x.shape[1] // 3
    cd = compute_dtype
    xq = x[:, :emb]
    xp1 = x[:, emb:2 * emb]
    xp2 = x[:, 2 * emb:]

    def mlp(v):
        h = jnp.dot(v.astype(cd), w1.astype(cd),
                    preferred_element_type=jnp.float32) + b1
        h = jax.nn.relu(h)
        z = jnp.dot(h.astype(cd), w2.astype(cd),
                    preferred_element_type=jnp.float32) + b2
        return jax.nn.relu(z)

    zp1, zp2, zql = mlp(xp1), mlp(xp2), mlp(xq)
    zd = jnp.abs(zp1 - zp2)
    zdqp1 = jnp.abs(zp1 - zql)
    zdqp2 = jnp.abs(zp2 - zql)
    z = jnp.concatenate([zp1, zp2, zd, zdqp1, zdqp2], axis=1)
    return jax.nn.relu(z @ w3 + b3).reshape(-1)


if __name__ == "__main__":
    emb_size = 32   # emb_size
    n_pairs = 8     # mC2 rows

    key = jax.random.PRNGKey(0)
    kx, kp = jax.random.split(key)
    x = jax.random.normal(kx, (n_pairs, 3 * emb_size), dtype=jnp.float32)
    params = init_params(kp, emb_size)

    # f32 path (matches the PyTorch module numerics).
    out = jax.block_until_ready(cats_forward(x, params))
    ref = jax.block_until_ready(cats_reference(x, params))
    assert out.shape == (n_pairs,)
    assert jnp.allclose(out, ref, rtol=1e-3, atol=1e-3), (out, ref)

    # bf16 matmul operands, f32 accumulation (recommended on v6e/v7x: halves
    # the dominant x HBM stream and the resident weight VMEM).
    out_bf = jax.block_until_ready(cats_forward(x, params, compute_dtype=jnp.bfloat16))
    ref_bf = jax.block_until_ready(cats_reference(x, params, compute_dtype=jnp.bfloat16))
    assert jnp.allclose(out_bf, ref_bf, rtol=2e-2, atol=2e-2), (out_bf, ref_bf)

    # Multi-tile grid with a ragged tail + the hidden-dim chunking path.
    n_big = 300
    xb = jax.random.normal(jax.random.PRNGKey(1), (n_big, 3 * emb_size), jnp.float32)
    out_big = jax.block_until_ready(
        cats_forward(xb, params, tile_n_max=128, hidden_chunk_max=128))
    ref_big = jax.block_until_ready(cats_reference(xb, params))
    assert out_big.shape == (n_big,)
    assert jnp.allclose(out_big, ref_big, rtol=1e-3, atol=1e-3)

    print("KERNEL_OK")
</pallas_src>

<mosaic_0001>
module attributes {stable_mosaic.version = 11 : i64} {
  func.func @cats_kernel(%arg0: i32, %arg1: memref<16x96xf32, #tpu.memory_space<vmem>>, %arg2: memref<32x160xf32, #tpu.memory_space<vmem>>, %arg3: memref<1x160xf32, #tpu.memory_space<vmem>>, %arg4: memref<160x32xf32, #tpu.memory_space<vmem>>, %arg5: memref<1x32xf32, #tpu.memory_space<vmem>>, %arg6: memref<5x32xf32, #tpu.memory_space<vmem>>, %arg7: memref<1xf32, #tpu.memory_space<smem>>, %arg8: memref<1x1x16xf32, #tpu.memory_space<vmem>>) attributes {dimension_semantics = [#tpu.dimension_semantics<parallel>], iteration_bounds = array<i64: 1>, scalar_prefetch = 0 : i64, scratch_operands = 0 : i64, tpu.core_type = #tpu.core_type<tc>, window_params = [{transform_indices = @transform_0, window_bounds = array<i64: 16, 96>}, {pipeline_mode = #tpu.pipeline_mode<synchronous>, transform_indices = @transform_1, window_bounds = array<i64: 32, 160>}, {pipeline_mode = #tpu.pipeline_mode<synchronous>, transform_indices = @transform_2, window_bounds = array<i64: 1, 160>}, {pipeline_mode = #tpu.pipeline_mode<synchronous>, transform_indices = @transform_3, window_bounds = array<i64: 160, 32>}, {pipeline_mode = #tpu.pipeline_mode<synchronous>, transform_indices = @transform_4, window_bounds = array<i64: 1, 32>}, {pipeline_mode = #tpu.pipeline_mode<synchronous>, transform_indices = @transform_5, window_bounds = array<i64: 5, 32>}, {transform_indices = @transform_6, window_bounds = array<i64: 1>}, {transform_indices = @transform_7, window_bounds = array<i64: 1, 1, 16>}]} {
    %c0 = arith.constant 0 : index
    %c0_0 = arith.constant 0 : index
    %0 = vector.load %arg1[%c0, %c0_0] : memref<16x96xf32, #tpu.memory_space<vmem>>, vector<16x96xf32>
    %1 = vector.extract_strided_slice %0 {offsets = [0, 0], sizes = [16, 32], strides = [1, 1]} : vector<16x96xf32> to vector<16x32xf32>
    %2 = vector.extract_strided_slice %0 {offsets = [0, 32], sizes = [16, 32], strides = [1, 1]} : vector<16x96xf32> to vector<16x32xf32>
    %3 = vector.extract_strided_slice %0 {offsets = [0, 64], sizes = [16, 32], strides = [1, 1]} : vector<16x96xf32> to vector<16x32xf32>
    %4 = tpu.concatenate %1, %2, %3 in 0 : vector<16x32xf32>, vector<16x32xf32>, vector<16x32xf32> -> vector<48x32xf32>
    %c0_1 = arith.constant 0 : index
    %c0_2 = arith.constant 0 : index
    %5 = vector.load %arg2[%c0_1, %c0_2] : memref<32x160xf32, #tpu.memory_space<vmem>>, vector<32x160xf32>
    %cst = arith.constant dense<0.000000e+00> : vector<48x160xf32>
    %6 = tpu.matmul %4, %5, %cst {dimension_numbers = #tpu.dot_dimension_numbers<[1], [0], [0], [1], [0, 0, 1, 1], [], []>} : vector<48x32xf32>, vector<32x160xf32>, vector<48x160xf32> -> vector<48x160xf32>
    %c0_3 = arith.constant 0 : index
    %c0_4 = arith.constant 0 : index
    %7 = vector.load %arg3[%c0_3, %c0_4] : memref<1x160xf32, #tpu.memory_space<vmem>>, vector<1x160xf32>
    %8 = vector.broadcast %7 : vector<1x160xf32> to vector<48x160xf32>
    %9 = arith.addf %6, %8 : vector<48x160xf32>
    %cst_5 = arith.constant 0.000000e+00 : f32
    %10 = vector.broadcast %cst_5 : f32 to vector<48x160xf32>
    %11 = arith.maximumf %9, %10 : vector<48x160xf32>
    %c0_6 = arith.constant 0 : index
    %c0_7 = arith.constant 0 : index
    %12 = vector.load %arg4[%c0_6, %c0_7] : memref<160x32xf32, #tpu.memory_space<vmem>>, vector<160x32xf32>
    %cst_8 = arith.constant dense<0.000000e+00> : vector<48x32xf32>
    %13 = tpu.matmul %11, %12, %cst_8 {dimension_numbers = #tpu.dot_dimension_numbers<[1], [0], [0], [1], [0, 0, 1, 1], [], []>} : vector<48x160xf32>, vector<160x32xf32>, vector<48x32xf32> -> vector<48x32xf32>
    %c0_9 = arith.constant 0 : index
    %c0_10 = arith.constant 0 : index
    %14 = vector.load %arg5[%c0_9, %c0_10] : memref<1x32xf32, #tpu.memory_space<vmem>>, vector<1x32xf32>
    %15 = vector.broadcast %14 : vector<1x32xf32> to vector<48x32xf32>
    %16 = arith.addf %13, %15 : vector<48x32xf32>
    %cst_11 = arith.constant 0.000000e+00 : f32
    %17 = vector.broadcast %cst_11 : f32 to vector<48x32xf32>
    %18 = arith.maximumf %16, %17 : vector<48x32xf32>
    %19 = vector.extract_strided_slice %18 {offsets = [0, 0], sizes = [16, 32], strides = [1, 1]} : vector<48x32xf32> to vector<16x32xf32>
    %20 = vector.extract_strided_slice %18 {offsets = [16, 0], sizes = [16, 32], strides = [1, 1]} : vector<48x32xf32> to vector<16x32xf32>
    %21 = vector.extract_strided_slice %18 {offsets = [32, 0], sizes = [16, 32], strides = [1, 1]} : vector<48x32xf32> to vector<16x32xf32>
    %22 = arith.subf %20, %21 : vector<16x32xf32>
    %23 = math.absf %22 : vector<16x32xf32>
    %24 = arith.subf %20, %19 : vector<16x32xf32>
    %25 = math.absf %24 : vector<16x32xf32>
    %26 = arith.subf %21, %19 : vector<16x32xf32>
    %27 = math.absf %26 : vector<16x32xf32>
    %c0_12 = arith.constant 0 : index
    %c0_13 = arith.constant 0 : index
    %28 = vector.load %arg6[%c0_12, %c0_13] : memref<5x32xf32, #tpu.memory_space<vmem>>, vector<5x32xf32>
    %29 = vector.extract_strided_slice %28 {offsets = [0, 0], sizes = [1, 32], strides = [1, 1]} : vector<5x32xf32> to vector<1x32xf32>
    %30 = vector.broadcast %29 : vector<1x32xf32> to vector<16x32xf32>
    %31 = arith.mulf %20, %30 : vector<16x32xf32>
    %32 = vector.extract_strided_slice %28 {offsets = [1, 0], sizes = [1, 32], strides = [1, 1]} : vector<5x32xf32> to vector<1x32xf32>
    %33 = vector.broadcast %32 : vector<1x32xf32> to vector<16x32xf32>
    %34 = arith.mulf %21, %33 : vector<16x32xf32>
    %35 = arith.addf %31, %34 : vector<16x32xf32>
    %36 = vector.extract_strided_slice %28 {offsets = [2, 0], sizes = [1, 32], strides = [1, 1]} : vector<5x32xf32> to vector<1x32xf32>
    %37 = vector.broadcast %36 : vector<1x32xf32> to vector<16x32xf32>
    %38 = arith.mulf %23, %37 : vector<16x32xf32>
    %39 = arith.addf %35, %38 : vector<16x32xf32>
    %40 = vector.extract_strided_slice %28 {offsets = [3, 0], sizes = [1, 32], strides = [1, 1]} : vector<5x32xf32> to vector<1x32xf32>
    %41 = vector.broadcast %40 : vector<1x32xf32> to vector<16x32xf32>
    %42 = arith.mulf %25, %41 : vector<16x32xf32>
    %43 = arith.addf %39, %42 : vector<16x32xf32>
    %44 = vector.extract_strided_slice %28 {offsets = [4, 0], sizes = [1, 32], strides = [1, 1]} : vector<5x32xf32> to vector<1x32xf32>
    %45 = vector.broadcast %44 : vector<1x32xf32> to vector<16x32xf32>
    %46 = arith.mulf %27, %45 : vector<16x32xf32>
    %47 = arith.addf %43, %46 : vector<16x32xf32>
    %cst_14 = arith.constant dense<0.000000e+00> : vector<16xf32>
    %48 = vector.multi_reduction <add>, %47, %cst_14 [1] : vector<16x32xf32> to vector<16xf32>
    %c0_15 = arith.constant 0 : index
    %49 = memref.load %arg7[%c0_15] : memref<1xf32, #tpu.memory_space<smem>>
    %50 = vector.broadcast %49 : f32 to vector<16xf32>
    %51 = arith.addf %48, %50 : vector<16xf32>
    %cst_16 = arith.constant 0.000000e+00 : f32
    %52 = vector.broadcast %cst_16 : f32 to vector<16xf32>
    %53 = arith.maximumf %51, %52 : vector<16xf32>
    %54 = vector.shape_cast %53 : vector<16xf32> to vector<1x1x16xf32>
    %c0_17 = arith.constant 0 : index
    %c0_18 = arith.constant 0 : index
    %c0_19 = arith.constant 0 : index
    %55 = vector.load %arg8[%c0_17, %c0_18, %c0_19] : memref<1x1x16xf32, #tpu.memory_space<vmem>>, vector<1x1x16xf32>
    tpu.vector_store %arg8[%c0_17, %c0_18, %c0_19], %54 {strides = array<i32>} : memref<1x1x16xf32, #tpu.memory_space<vmem>>, vector<1x1x16xf32>,
    return
  }
  func.func @transform_0(%arg0: i32) -> (i32, i32) {
    %c0_i32 = arith.constant 0 : i32
    %c0_i32_0 = arith.constant 0 : i32
    return %arg0, %c0_i32 : i32, i32
  }
  func.func @transform_1(%arg0: i32) -> (i32, i32) {
    %c0_i32 = arith.constant 0 : i32
    %c0_i32_0 = arith.constant 0 : i32
    %c0_i32_1 = arith.constant 0 : i32
    return %c0_i32, %c0_i32_0 : i32, i32
  }
  func.func @transform_2(%arg0: i32) -> (i32, i32) {
    %c0_i32 = arith.constant 0 : i32
    %c0_i32_0 = arith.constant 0 : i32
    %c0_i32_1 = arith.constant 0 : i32
    return %c0_i32, %c0_i32_0 : i32, i32
  }
  func.func @transform_3(%arg0: i32) -> (i32, i32) {
    %c0_i32 = arith.constant 0 : i32
    %c0_i32_0 = arith.constant 0 : i32
    %c0_i32_1 = arith.constant 0 : i32
    return %c0_i32, %c0_i32_0 : i32, i32
  }
  func.func @transform_4(%arg0: i32) -> (i32, i32) {
    %c0_i32 = arith.constant 0 : i32
    %c0_i32_0 = arith.constant 0 : i32
    %c0_i32_1 = arith.constant 0 : i32
    return %c0_i32, %c0_i32_0 : i32, i32
  }
  func.func @transform_5(%arg0: i32) -> (i32, i32) {
    %c0_i32 = arith.constant 0 : i32
    %c0_i32_0 = arith.constant 0 : i32
    %c0_i32_1 = arith.constant 0 : i32
    return %c0_i32, %c0_i32_0 : i32, i32
  }
  func.func @transform_6(%arg0: i32) -> i32 {
    %c0_i32 = arith.constant 0 : i32
    %c0_i32_0 = arith.constant 0 : i32
    return %c0_i32 : i32
  }
  func.func @transform_7(%arg0: i32) -> (i32, i32, i32) {
    %c0_i32 = arith.constant 0 : i32
    %c0_i32_0 = arith.constant 0 : i32
    %c0_i32_1 = arith.constant 0 : i32
    return %arg0, %c0_i32, %c0_i32_0 : i32, i32, i32
  }
}

</mosaic_0001>

<llo_original>
// kernel: tpu_custom_call.1
$region0: #{tpu_custom_call.1}
  #allocation0 [shape = 'u32[]', space=smem, size = 0x4, offset = 0x4, fixed_abs, tag = 'smem constant byte address 0x4 - core index']
  #allocation1 [shape = 'u32[144,128]{1,0:T(1,128)}', space=vmem, size = 0x12000, scoped, tag = 'internal scratch']
  #allocation2 [shape = 'f32[1]{0:T(128)S(6)}', space=smem, size = 0x200, scoped, tag = 'scoped memory for tpu_custom_call.1']
  %s0 = inlined_call_operand.vmem [shape: f32[16,96], index: 0, kind: input, shape index: {}]
  %s1 = inlined_call_operand.vmem [shape: f32[32,160], index: 1, kind: input, shape index: {}]
  %s2 = inlined_call_operand.vmem [shape: f32[1,160], index: 2, kind: input, shape index: {}]
  %s3 = inlined_call_operand.vmem [shape: f32[160,32], index: 3, kind: input, shape index: {}]
  %s4 = inlined_call_operand.vmem [shape: f32[1,32], index: 4, kind: input, shape index: {}]
  %s5 = inlined_call_operand.vmem [shape: f32[5,32], index: 5, kind: input, shape index: {}]
  %s6 = inlined_call_operand.<no memory space> [shape: f32[1], index: 6, kind: input, shape index: {}]
  %s7 = inlined_call_operand.hbm [shape: f32[1,1,16], index: 7, kind: output, shape index: {}]
  %s8 = sld [smem:[#allocation0]]
  $region38: #{tpu_custom_call.1} parent=0
    _
  %s10 = ssub.s32 1, %s8
  %s11 = scalar_select 0, %s10, %s8
  %12 = sst [smem:[#allocation2]] %s6
  $region1: #{tpu_custom_call.1} parent=0
    #allocation3 [shape = 'u8[512]{0}', space=vmem, size = 0x400, scoped, tag = 'output window, operand 0, single buffered']
    #allocation4 [shape = 's32[1]{0}', space=sflag, size = 0x4, scoped, tag = 'scoped memory for tpu_custom_call.1']
    %13 = vsyncpa [#allocation4], 0
    // Predicated region
    $region2: #{tpu_custom_call.1} parent=1 // pred_check
      _
    $region3: #{tpu_custom_call.1} parent=1 // pred_check_branch
      %15 = sbr.rel (0) target = $region5
    $region4: #{tpu_custom_call.1} parent=1 // pred_region
      _
    $region5: #{tpu_custom_call.1} parent=1 // pred_fallthru
      _
    // Predicated region
    $region6: #{tpu_custom_call.1} parent=1 // pred_check
      _
    $region7: #{tpu_custom_call.1} parent=1 // pred_check_branch
      %17 = sbr.rel (0) target = $region9
    $region8: #{tpu_custom_call.1} parent=1 // pred_region
      _
    $region9: #{tpu_custom_call.1} parent=1 // pred_fallthru
      _
    // Predicated region
    $region10: #{tpu_custom_call.1} parent=1 // pred_check
      _
    $region11: #{tpu_custom_call.1} parent=1 // pred_check_branch
      %19 = sbr.rel (0) target = $region13
    $region12: #{tpu_custom_call.1} parent=1 // pred_region
      _
    $region13: #{tpu_custom_call.1} parent=1 // pred_fallthru
      _
    // Predicated region
    $region14: #{tpu_custom_call.1} parent=1 // pred_check
      _
    $region15: #{tpu_custom_call.1} parent=1 // pred_check_branch
      %21 = sbr.rel (0) target = $region17
    $region16: #{tpu_custom_call.1} parent=1 // pred_region
      _
    $region17: #{tpu_custom_call.1} parent=1 // pred_fallthru
      _
    // Predicated region
    $region18: #{tpu_custom_call.1} parent=1 // pred_check
      _
    $region19: #{tpu_custom_call.1} parent=1 // pred_check_branch
      %23 = sbr.rel (0) target = $region21
    $region20: #{tpu_custom_call.1} parent=1 // pred_region
      _
    $region21: #{tpu_custom_call.1} parent=1 // pred_fallthru
      _
    // Predicated region
    $region22: #{tpu_custom_call.1} parent=1 // pred_check
      _
    $region23: #{tpu_custom_call.1} parent=1 // pred_check_branch
      %25 = sbr.rel (0) target = $region25
    $region24: #{tpu_custom_call.1} parent=1 // pred_region
      _
    $region25: #{tpu_custom_call.1} parent=1 // pred_fallthru
      _
    // Predicated region
    $region26: #{tpu_custom_call.1} parent=1 // pred_check
      _
    $region27: #{tpu_custom_call.1} parent=1 // pred_check_branch
      %27 = sbr.rel (0) target = $region29
    $region28: #{tpu_custom_call.1} parent=1 // pred_region
      _
    $region29: #{tpu_custom_call.1} parent=1 // pred_fallthru
      _
    %v28 = vld [vmem:[%s0] sm:$0xff]
    %v29 = vld [vmem:[%s0 + $0x8] sm:$0xff]
    %32 = vrot.lane.b32.xlu0 %v28, 96
    %v33 = vpop.permute.xlu0 %32
    %34 = vrot.lane.b32.xlu0 %v29, 96
    %v35 = vpop.permute.xlu0 %34
    %36 = vrot.lane.b32.xlu0 %v28, 64
    %v37 = vpop.permute.xlu0 %36
    %38 = vrot.lane.b32.xlu0 %v29, 64
    %v39 = vpop.permute.xlu0 %38
    %v40 = vld [vmem:[%s1] sm:$0xff]
    %v41 = vld [vmem:[%s1 + $0x8] sm:$0xff]
    %v42 = vld [vmem:[%s1 + $0x10] sm:$0xff]
    %v43 = vld [vmem:[%s1 + $0x18] sm:$0xff]
    %v44 = vld [vmem:[%s1 + $0x20] sm:$0xff]
    %v45 = vld [vmem:[%s1 + $0x28] sm:$0xff]
    %v46 = vld [vmem:[%s1 + $0x30] sm:$0xff]
    %v47 = vld [vmem:[%s1 + $0x38] sm:$0xff]
    %v48 = vld [vmem:[%s2] sm:$0x3]
    %v50 = vlaneseq
    %v51 = vshrl.u32 %v50, 7
    %v52 = vsub.s32 0, %v51
    %v53 = vrot.slane %v48, %v52
    %v54 = vlaneseq
    %v55 = vshrl.u32 %v54, 7
    %v56 = vsub.s32 1, %v55
    %v57 = vrot.slane %v48, %v56
    %vm60 = vcmask 261120
    %v61 = vsel %vm60, %v28, 0
    %v63 = vsel %vm60, %v29, 0
    %v65 = vsel %vm60, %v33, 0
    %v67 = vsel %vm60, %v35, 0
    %v69 = vsel %vm60, %v37, 0
    %v71 = vsel %vm60, %v39, 0
    %73 = vmatprep.subr.mxu0 %v41
    %74 = vmatpush1.msra.mxu0 %v40
    %75 = vmatprep.subr.mxu0 %v43
    %76 = vmatpush1.msra.mxu0 %v42
    %77 = vmatprep.subr.mxu0 %v45
    %78 = vmatpush1.msra.mxu0 %v44
    %79 = vmatprep.subr.mxu0 %v47
    %80 = vmatpush1.msra.mxu0 %v46
    %81 = vmatprep.subr.mxu0 0.0
    %82 = vmatpush1.msra.mxu0 0.0
    %83 = vmatprep.subr.mxu0 0.0
    %84 = vmatpush1.msra.mxu0 0.0
    %85 = vmatprep.subr.mxu0 0.0
    %86 = vmatpush1.msra.mxu0 0.0
    %87 = vmatprep.subr.mxu0 0.0
    %88 = vmatpush1.msra.mxu0 0.0
    %89 = vmatprep.subr.mxu0 0.0
    %90 = vmatpush1.msra.mxu0 0.0
    %91 = vmatprep.subr.mxu0 0.0
    %92 = vmatpush1.msra.mxu0 0.0
    %93 = vmatprep.subr.mxu0 0.0
    %94 = vmatpush1.msra.mxu0 0.0
    %95 = vmatprep.subr.mxu0 0.0
    %96 = vmatpush1.msra.mxu0 0.0
    %97 = vmatprep.subr.mxu0 0.0
    %98 = vmatpush1.msra.mxu0 0.0
    %99 = vmatprep.subr.mxu0 0.0
    %100 = vmatpush1.msra.mxu0 0.0
    %101 = vmatprep.subr.mxu0 0.0
    %102 = vmatpush1.msra.mxu0 0.0
    %103 = vmatprep.subr.mxu0 0.0
    %104 = vmatpush1.msra.mxu0 0.0
    %105 = vmatprep.subr.mxu0 0.0
    %106 = vmatpush1.msra.mxu0 0.0
    %107 = vmatprep.subr.mxu0 0.0
    %108 = vmatpush1.msra.mxu0 0.0
    %109 = vmatprep.subr.mxu0 0.0
    %110 = vmatpush1.msra.mxu0 0.0
    %111 = vmatprep.subr.mxu0 0.0
    %112 = vmatpush1.msra.mxu0 0.0
    %113 = vmatprep.subr.mxu0 0.0
    %114 = vmatpush1.msra.mxu0 0.0
    %115 = vmatprep.subr.mxu0 0.0
    %116 = vmatpush1.msra.mxu0 0.0
    %117 = vmatprep.subr.mxu0 0.0
    %118 = vmatpush1.msra.mxu0 0.0
    %119 = vmatprep.subr.mxu0 0.0
    %120 = vmatpush1.msra.mxu0 0.0
    %121 = vmatprep.subr.mxu0 0.0
    %122 = vmatpush1.msra.mxu0 0.0
    %123 = vmatprep.subr.mxu0 0.0
    %124 = vmatpush1.msra.mxu0 0.0
    %125 = vmatprep.subr.mxu0 0.0
    %126 = vmatpush1.msra.mxu0 0.0
    %127 = vmatprep.subr.mxu0 0.0
    %128 = vmatpush1.msra.mxu0 0.0
    %129 = vmatprep.subr.mxu0 0.0
    %130 = vmatpush1.msra.mxu0 0.0
    %131 = vmatprep.subr.mxu0 0.0
    %132 = vmatpush1.msra.mxu0 0.0
    %133 = vmatprep.subr.mxu0 0.0
    %134 = vmatpush1.msra.mxu0 0.0
    %135 = vmatprep.subr.mxu0 0.0
    %136 = vmatpush1.msra.mxu0 0.0
    %137 = vmatprep.mubr.f32.mxu0 0.0
    %138 = vmatmul.mubr.f32.gmra.mrb[0].mxu0 %v61
    %v139 = vpop.f32.mrb[0].mxu0
    %v140 = vadd.f32 %v53, %v139
    %v141 = vpop.f32.mrb[0].mxu0
    %v142 = vadd.f32 %v57, %v141
    %143 = vmatprep.mubr.f32.mxu0 0.0
    %144 = vmatmul.mubr.f32.gmra.mrb[0].mxu0 %v63
    %v145 = vpop.f32.mrb[0].mxu0
    %v146 = vadd.f32 %v53, %v145
    %v147 = vpop.f32.mrb[0].mxu0
    %v148 = vadd.f32 %v57, %v147
    %149 = vmatprep.mubr.f32.mxu0 0.0
    %150 = vmatmul.mubr.f32.gmra.mrb[0].mxu0 %v65
    %v151 = vpop.f32.mrb[0].mxu0
    %v152 = vadd.f32 %v53, %v151
    %v153 = vpop.f32.mrb[0].mxu0
    %v154 = vadd.f32 %v57, %v153
    %155 = vmatprep.mubr.f32.mxu0 0.0
    %156 = vmatmul.mubr.f32.gmra.mrb[0].mxu0 %v67
    %v157 = vpop.f32.mrb[0].mxu0
    %v158 = vadd.f32 %v53, %v157
    %v159 = vpop.f32.mrb[0].mxu0
    %v160 = vadd.f32 %v57, %v159
    %161 = vmatprep.mubr.f32.mxu0 0.0
    %162 = vmatmul.mubr.f32.gmra.mrb[0].mxu0 %v69
    %v163 = vpop.f32.mrb[0].mxu0
    %v164 = vadd.f32 %v53, %v163
    %v165 = vpop.f32.mrb[0].mxu0
    %v166 = vadd.f32 %v57, %v165
    %167 = vmatprep.mubr.f32.mxu0 0.0
    %168 = vmatmul.mubr.f32.gmra.mrb[0].mxu0 %v71
    %v169 = vpop.f32.mrb[0].mxu0
    %v170 = vadd.f32 %v53, %v169
    %v171 = vpop.f32.mrb[0].mxu0
    %v172 = vadd.f32 %v57, %v171
    %173 = vdwg.mxu0
    %v174 = vmax.f32 %v140, 0.0
    %v175 = vmax.f32 %v142, 0.0
    %v176 = vmax.f32 %v146, 0.0
    %v177 = vmax.f32 %v148, 0.0
    %v178 = vmax.f32 %v152, 0.0
    %v179 = vmax.f32 %v154, 0.0
    %v180 = vmax.f32 %v158, 0.0
    %v181 = vmax.f32 %v160, 0.0
    %v182 = vmax.f32 %v164, 0.0
    %v183 = vmax.f32 %v166, 0.0
    %v184 = vmax.f32 %v170, 0.0
    %v185 = vmax.f32 %v172, 0.0
    %v186 = vld [vmem:[%s3] sm:$0xff]
    %v187 = vld [vmem:[%s3 + $0x8] sm:$0xff]
    %v188 = vld [vmem:[%s3 + $0x10] sm:$0xff]
    %v189 = vld [vmem:[%s3 + $0x18] sm:$0xff]
    %v190 = vld [vmem:[%s3 + $0x20] sm:$0xff]
    %v191 = vld [vmem:[%s3 + $0x28] sm:$0xff]
    %v192 = vld [vmem:[%s3 + $0x30] sm:$0xff]
    %v193 = vld [vmem:[%s3 + $0x38] sm:$0xff]
    %v194 = vld [vmem:[%s3 + $0x40] sm:$0xff]
    %v195 = vld [vmem:[%s3 + $0x48] sm:$0xff]
    %v196 = vld [vmem:[%s3 + $0x50] sm:$0xff]
    %v197 = vld [vmem:[%s3 + $0x58] sm:$0xff]
    %v198 = vld [vmem:[%s3 + $0x60] sm:$0xff]
    %v199 = vld [vmem:[%s3 + $0x68] sm:$0xff]
    %v200 = vld [vmem:[%s3 + $0x70] sm:$0xff]
    %v201 = vld [vmem:[%s3 + $0x78] sm:$0xff]
    %v202 = vld [vmem:[%s3 + $0x80] sm:$0xff]
    %v203 = vld [vmem:[%s3 + $0x88] sm:$0xff]
    %v204 = vld [vmem:[%s3 + $0x90] sm:$0xff]
    %v205 = vld [vmem:[%s3 + $0x98] sm:$0xff]
    %v206 = vld [vmem:[%s4] sm:$0x1]
    %v208 = vlaneseq
    %v209 = vshrl.u32 %v208, 7
    %v210 = vsub.s32 0, %v209
    %v211 = vrot.slane %v206, %v210
    %v214 = vsel %vm60, %v175, 0
    %v217 = vsel %vm60, %v177, 0
    %v220 = vsel %vm60, %v179, 0
    %v223 = vsel %vm60, %v181, 0
    %v226 = vsel %vm60, %v183, 0
    %v229 = vsel %vm60, %v185, 0
    %231 = vmatprep.subr.mxu0 0.0
    %232 = vmatpush1.msra.mxu0 %v186
    %233 = vmatprep.subr.mxu0 0.0
    %234 = vmatpush1.msra.mxu0 %v187
    %235 = vmatprep.subr.mxu0 0.0
    %236 = vmatpush1.msra.mxu0 %v188
    %237 = vmatprep.subr.mxu0 0.0
    %238 = vmatpush1.msra.mxu0 %v189
    %239 = vmatprep.subr.mxu0 0.0
    %240 = vmatpush1.msra.mxu0 %v190
    %241 = vmatprep.subr.mxu0 0.0
    %242 = vmatpush1.msra.mxu0 %v191
    %243 = vmatprep.subr.mxu0 0.0
    %244 = vmatpush1.msra.mxu0 %v192
    %245 = vmatprep.subr.mxu0 0.0
    %246 = vmatpush1.msra.mxu0 %v193
    %247 = vmatprep.subr.mxu0 0.0
    %248 = vmatpush1.msra.mxu0 %v194
    %249 = vmatprep.subr.mxu0 0.0
    %250 = vmatpush1.msra.mxu0 %v195
    %251 = vmatprep.subr.mxu0 0.0
    %252 = vmatpush1.msra.mxu0 %v196
    %253 = vmatprep.subr.mxu0 0.0
    %254 = vmatpush1.msra.mxu0 %v197
    %255 = vmatprep.subr.mxu0 0.0
    %256 = vmatpush1.msra.mxu0 %v198
    %257 = vmatprep.subr.mxu0 0.0
    %258 = vmatpush1.msra.mxu0 %v199
    %259 = vmatprep.subr.mxu0 0.0
    %260 = vmatpush1.msra.mxu0 %v200
    %261 = vmatprep.subr.mxu0 0.0
    %262 = vmatpush1.msra.mxu0 %v201
    %263 = vmatprep.subr.mxu0 0.0
    %264 = vmatpush1.msra.mxu0 %v202
    %265 = vmatprep.subr.mxu0 0.0
    %266 = vmatpush1.msra.mxu0 %v203
    %267 = vmatprep.subr.mxu0 0.0
    %268 = vmatpush1.msra.mxu0 %v204
    %269 = vmatprep.subr.mxu0 0.0
    %270 = vmatpush1.msra.mxu0 %v205
    %271 = vmatprep.subr.mxu0 0.0
    %272 = vmatpush1.msra.mxu0 0.0
    %273 = vmatprep.subr.mxu0 0.0
    %274 = vmatpush1.msra.mxu0 0.0
    %275 = vmatprep.subr.mxu0 0.0
    %276 = vmatpush1.msra.mxu0 0.0
    %277 = vmatprep.subr.mxu0 0.0
    %278 = vmatpush1.msra.mxu0 0.0
    %279 = vmatprep.subr.mxu0 0.0
    %280 = vmatpush1.msra.mxu0 0.0
    %281 = vmatprep.subr.mxu0 0.0
    %282 = vmatpush1.msra.mxu0 0.0
    %283 = vmatprep.subr.mxu0 0.0
    %284 = vmatpush1.msra.mxu0 0.0
    %285 = vmatprep.subr.mxu0 0.0
    %286 = vmatpush1.msra.mxu0 0.0
    %287 = vmatprep.subr.mxu0 0.0
    %288 = vmatpush1.msra.mxu0 0.0
    %289 = vmatprep.subr.mxu0 0.0
    %290 = vmatpush1.msra.mxu0 0.0
    %291 = vmatprep.subr.mxu0 0.0
    %292 = vmatpush1.msra.mxu0 0.0
    %293 = vmatprep.subr.mxu0 0.0
    %294 = vmatpush1.msra.mxu0 0.0
    %295 = vmatprep.mubr.f32.mxu0 %v214
    %296 = vmatmul.mubr.f32.gmra.mrb[0].mxu0 %v174
    %v297 = vpop.f32.mrb[0].mxu0
    %v298 = vadd.f32 %v211, %v297
    %v299 = vpop.f32.mrb[0].mxu0
    %300 = vmatprep.mubr.f32.mxu0 %v217
    %301 = vmatmul.mubr.f32.gmra.mrb[0].mxu0 %v176
    %v302 = vpop.f32.mrb[0].mxu0
    %v303 = vadd.f32 %v211, %v302
    %v304 = vpop.f32.mrb[0].mxu0
    %305 = vmatprep.mubr.f32.mxu0 %v220
    %306 = vmatmul.mubr.f32.gmra.mrb[0].mxu0 %v178
    %v307 = vpop.f32.mrb[0].mxu0
    %v308 = vadd.f32 %v211, %v307
    %v309 = vpop.f32.mrb[0].mxu0
    %310 = vmatprep.mubr.f32.mxu0 %v223
    %311 = vmatmul.mubr.f32.gmra.mrb[0].mxu0 %v180
    %v312 = vpop.f32.mrb[0].mxu0
    %v313 = vadd.f32 %v211, %v312
    %v314 = vpop.f32.mrb[0].mxu0
    %315 = vmatprep.mubr.f32.mxu0 %v226
    %316 = vmatmul.mubr.f32.gmra.mrb[0].mxu0 %v182
    %v317 = vpop.f32.mrb[0].mxu0
    %v318 = vadd.f32 %v211, %v317
    %v319 = vpop.f32.mrb[0].mxu0
    %320 = vmatprep.mubr.f32.mxu0 %v229
    %321 = vmatmul.mubr.f32.gmra.mrb[0].mxu0 %v184
    %v322 = vpop.f32.mrb[0].mxu0
    %v323 = vadd.f32 %v211, %v322
    %v324 = vpop.f32.mrb[0].mxu0
    %325 = vdwg.mxu0
    %v326 = vmax.f32 %v298, 0.0
    %v327 = vmax.f32 %v303, 0.0
    %v328 = vmax.f32 %v308, 0.0
    %v329 = vmax.f32 %v313, 0.0
    %v330 = vmax.f32 %v318, 0.0
    %v331 = vmax.f32 %v323, 0.0
    %v332 = vsub.f32 %v328, %v330
    %v333 = vsub.f32 %v329, %v331
    %v334 = vand.u32 2147483647, %v332
    %v335 = vand.u32 2147483647, %v333
    %v336 = vsub.f32 %v328, %v326
    %v337 = vsub.f32 %v329, %v327
    %v338 = vand.u32 2147483647, %v336
    %v339 = vand.u32 2147483647, %v337
    %v340 = vsub.f32 %v330, %v326
    %v341 = vsub.f32 %v331, %v327
    %v342 = vand.u32 2147483647, %v340
    %v343 = vand.u32 2147483647, %v341
    %v344 = vld [vmem:[%s5] sm:$0x1f]
    %v345 = vlaneseq
    %v346 = vshrl.u32 %v345, 7
    %v347 = vsub.s32 0, %v346
    %v348 = vrot.slane %v344, %v347
    %v349 = vmul.f32 %v328, %v348
    %v350 = vmul.f32 %v329, %v348
    %v351 = vlaneseq
    %v352 = vshrl.u32 %v351, 7
    %v353 = vsub.s32 1, %v352
    %v354 = vrot.slane %v344, %v353
    %v355 = vmul.f32 %v330, %v354
    %v356 = vmul.f32 %v331, %v354
    %v357 = vadd.f32 %v349, %v355
    %v358 = vadd.f32 %v350, %v356
    %v359 = vlaneseq
    %v360 = vshrl.u32 %v359, 7
    %v361 = vsub.s32 2, %v360
    %v362 = vrot.slane %v344, %v361
    %v363 = vmul.f32 %v334, %v362
    %v364 = vmul.f32 %v335, %v362
    %v365 = vadd.f32 %v357, %v363
    %v366 = vadd.f32 %v358, %v364
    %v367 = vlaneseq
    %v368 = vshrl.u32 %v367, 7
    %v369 = vsub.s32 3, %v368
    %v370 = vrot.slane %v344, %v369
    %v371 = vmul.f32 %v338, %v370
    %v372 = vmul.f32 %v339, %v370
    %v373 = vadd.f32 %v365, %v371
    %v374 = vadd.f32 %v366, %v372
    %v375 = vlaneseq
    %v376 = vshrl.u32 %v375, 7
    %v377 = vsub.s32 4, %v376
    %v378 = vrot.slane %v344, %v377
    %v379 = vmul.f32 %v342, %v378
    %v380 = vmul.f32 %v343, %v378
    %v381 = vadd.f32 %v373, %v379
    %v382 = vadd.f32 %v374, %v380
    %v383 = vsel %vm60, %v381, 0.0
    %384 = vadd.xlane.f32.xlu0 %v383
    %v385 = vpop.xlane.xlu0 %384
    %v386 = vsel %vm60, %v382, 0.0
    %387 = vadd.xlane.f32.xlu0 %v386
    %v388 = vpop.xlane.xlu0 %387
    %s389 = sld [smem:[#allocation2]]
    %v390 = vstv %s389
    %v391 = vadd.f32 %v385, %v390
    %v392 = vadd.f32 %v388, %v390
    %v393 = vmax.f32 %v391, 0.0
    %v394 = vmax.f32 %v392, 0.0
    %v397 = vlaneseq
    %v398 = vand.u32 %v397, 127
    %v399 = vlaneseq
    %v400 = vshrl.u32 %v399, 7
    %v401 = vsub.s32 %v398, %v400
    %v402 = vrot.slane %v393, %v401
    %v403 = vadd.s32 %v398, 4294967288
    %v404 = vlaneseq
    %v405 = vshrl.u32 %v404, 7
    %v406 = vsub.s32 %v403, %v405
    %v407 = vrot.slane %v394, %v406
    %vm408 = vcmask 130112
    %v409 = vsel %vm408, %v407, %v402
    %vm411 = vcmask 122880
    %412 = vst.msk [vmem:[#allocation3] sm:$0x1] %vm411, %v409
    // Predicated region
    $region30: #{tpu_custom_call.1} parent=1 // pred_check
      _
    $region31: #{tpu_custom_call.1} parent=1 // pred_check_branch
      %414 = sbr.rel (0) target = $region33
    $region32: #{tpu_custom_call.1} parent=1 // pred_region
      %s416 = ssub.s32 16, 16
      %417 = vsyncadd [#allocation4], %s416
      %s419 = sshll.u32 [#allocation3], 4
      %s420 = int_to_ptr.vmem [resolvable:$true] %s419
      %422 = dma.vmem_to_hbm [thread:$0]  %s420, 16, %s7, [#allocation4]
    $region33: #{tpu_custom_call.1} parent=1 // pred_fallthru
      _
    // Predicated region
    $region34: #{tpu_custom_call.1} parent=1 // pred_check
      _
    $region35: #{tpu_custom_call.1} parent=1 // pred_check_branch
      %424 = sbr.rel (0) target = $region37
    $region36: #{tpu_custom_call.1} parent=1 // pred_region
      %425 = dma.done [#allocation4], 16
    $region37: #{tpu_custom_call.1} parent=1 // pred_fallthru
      _
    %426 = vsyncpa [#allocation4], 1

</llo_original>
